<compile_context>
chip_gen: v6e
topology: v6e:2x2x1
jax: 0.10.0
libtpu: 0.0.40
codegen_flags: <defaults>
</compile_context>

<pallas_src>
import numpy as np
import jax
import jax.numpy as jnp
from jax.experimental import pallas as pl
from jax.experimental.pallas import tpu as pltpu


def offsetnet_kernel(hidden_ref, wfc_ref, bfc_ref, offx_ref, w9a_ref, out_ref):
    # hidden_ref: (TB, D) f32    wfc_ref: (D, 9) bf16   bfc_ref: (1, 9) f32
    # offx_ref:   (TB, 1) f32    w9a_ref: (9, 3) f32    out_ref: (TB, 2) f32
    # In-kernel bf16 cast (VPU) keeps the MXU on the packed 16-row path
    # without an extra HBM pass in the wrapper.
    h = hidden_ref[...].astype(jnp.bfloat16)
    logits = jnp.dot(h, wfc_ref[...],
                     preferred_element_type=jnp.float32) + bfc_ref[...]
    # Numerically-stable softmax numerator; denominator is folded into the
    # augmented matmul (ones column of w9a), normalization into final scale.
    m = jnp.max(logits, axis=1, keepdims=True)
    e = jnp.exp(logits - m)                                   # (TB, 9) f32
    nd = jnp.dot(e, w9a_ref[...],
                 preferred_element_type=jnp.float32)          # (TB, 3)
    scale = offx_ref[...] * pl.reciprocal(nd[:, 2:3], approx=True)
    out_ref[...] = nd[:, :2] * scale


def _round8_down(x):
    return max(8, (int(x) // 8) * 8)


def offsetnet_forward(off_x, hidden, wfc_t, bfc, w9, *, tb=None,
                      vmem_budget_bytes=8 << 20):
    """off_x: (B, 1, 1), hidden: (B, in_dim) -> out: (B, 2)"""
    B, D = hidden.shape

    # Small operands (no extra pass over the dominant `hidden` array).
    offx2d = off_x.reshape(B, 1).astype(jnp.float32)
    wfc_bf = wfc_t.astype(jnp.bfloat16)                       # (D, 9)
    bfc2d = bfc.reshape(1, 9).astype(jnp.float32)
    w9a = jnp.concatenate(                                    # (9, 3): [x, y, 1]
        [w9.astype(jnp.float32), jnp.ones((9, 1), jnp.float32)], axis=1)

    Bp = ((B + 7) // 8) * 8
    itemsize = jnp.dtype(hidden.dtype).itemsize

    if tb is None:
        # Size TB from a per-step VMEM budget (double-buffered hidden slab
        # dominates); budget fits v5e's 16 MiB scoped default with headroom.
        per_row = 2 * (D * itemsize + 4 + 8)      # hidden + off_x + out, x2 buffers
        TB = _round8_down(vmem_budget_bytes // per_row)
        if Bp >= 16:
            # Keep >= 2 grid steps so the "parallel" batch axis can be
            # sharded over both v7x TensorCores.
            TB = min(TB, _round8_down(Bp // 2))
    else:
        TB = _round8_down(tb)
    TB = min(TB, Bp)

    if TB >= Bp:
        # Single tile (e.g. the B~2 RNN-step shape): skip the grid/pipeline
        # machinery, keep whole (tiny) arrays resident in VMEM.
        return pl.pallas_call(
            offsetnet_kernel,
            out_shape=jax.ShapeDtypeStruct((B, 2), jnp.float32),
            in_specs=[pl.BlockSpec(memory_space=pltpu.MemorySpace.VMEM)] * 5,
            out_specs=pl.BlockSpec(memory_space=pltpu.MemorySpace.VMEM),
        )(hidden, wfc_bf, bfc2d, offx2d, w9a)

    grid = (pl.cdiv(B, TB),)                      # last block may be partial
    weights_bytes = D * 9 * 2 + 9 * 4 + 9 * 3 * 4
    needed = 2 * TB * (D * itemsize + 4 + 8) + weights_bytes
    vmem_limit = int(min(max(needed + (2 << 20), 4 << 20), 32 << 20))

    return pl.pallas_call(
        offsetnet_kernel,
        out_shape=jax.ShapeDtypeStruct((B, 2), jnp.float32),
        grid_spec=pltpu.PrefetchScalarGridSpec(
            num_scalar_prefetch=0,
            grid=grid,
            in_specs=[
                pl.BlockSpec((TB, D), lambda i: (i, 0)),      # hidden (tiled)
                pl.BlockSpec((D, 9), lambda i: (0, 0)),       # wfc    (pinned)
                pl.BlockSpec((1, 9), lambda i: (0, 0)),       # bfc    (pinned)
                pl.BlockSpec((TB, 1), lambda i: (i, 0)),      # off_x  (tiled)
                pl.BlockSpec((9, 3), lambda i: (0, 0)),       # w9aug  (pinned)
            ],
            out_specs=pl.BlockSpec((TB, 2), lambda i: (i, 0)),
        ),
        compiler_params=pltpu.CompilerParams(
            dimension_semantics=("parallel",),
            vmem_limit_bytes=vmem_limit),
    )(hidden, wfc_bf, bfc2d, offx2d, w9a)


def make_params(in_dim, key):
    """Deterministic parameter construction matching OffsetNet.__init__."""
    # nn.Linear(in_dim, 9): weight (9, in_dim), bias (9,), PyTorch-style init.
    k_w, k_b = jax.random.split(key)
    bound = 1.0 / np.sqrt(in_dim)
    wfc = jax.random.uniform(k_w, (9, in_dim), jnp.float32, -bound, bound)
    bfc = jax.random.uniform(k_b, (9,), jnp.float32, -bound, bound)
    # Fixed self.linear weight: (18, 1), kept here directly as (9, 2).
    T = 0.166
    w9 = jnp.array([[-T, -T], [-T, 0.0], [-T, T],
                    [0.0, -T], [0.0, T],
                    [T, -T], [T, 0.0], [T, T],
                    [0.0, 0.0]], dtype=jnp.float32)
    # Pre-transpose fc weight so the kernel does hidden @ (in_dim, 9).
    return wfc.T, bfc, w9


def reference_forward(off_x, hidden, wfc_t, bfc, w9):
    # Matches the kernel's bf16 input precision for the first matmul.
    h = hidden.astype(jnp.bfloat16).astype(jnp.float32)
    w = wfc_t.astype(jnp.bfloat16).astype(jnp.float32)
    logits = h @ w + bfc[None, :]
    p = jax.nn.softmax(logits, axis=1)
    return (p @ w9) * off_x.reshape(-1, 1)


if __name__ == "__main__":
    in_dim = 32
    key = jax.random.PRNGKey(0)
    k_params, k_h, k_o = jax.random.split(key, 3)
    wfc_t, bfc, w9 = make_params(in_dim, k_params)

    # Test 1: module-sized shapes (batch=2) -> single-tile, grid-less path.
    batch = 2
    hidden = jax.random.normal(k_h, (batch, in_dim), jnp.float32)
    off_x = jax.random.normal(k_o, (batch, 1, 1), jnp.float32)
    out = jax.block_until_ready(offsetnet_forward(off_x, hidden, wfc_t, bfc, w9))
    ref = reference_forward(off_x, hidden, wfc_t, bfc, w9)
    np.testing.assert_allclose(np.asarray(out), np.asarray(ref),
                               rtol=2e-3, atol=1e-3)
    assert out.shape == (batch, 2)

    # Test 2: multi-tile grid with a partial last block (B=20, TB=8 -> 3 steps,
    # last step covers only 4 valid rows; no wrapper-side padding).
    batch2 = 20
    k_h2, k_o2 = jax.random.split(k_h)
    hidden2 = jax.random.normal(k_h2, (batch2, in_dim), jnp.float32)
    off_x2 = jax.random.normal(k_o2, (batch2, 1, 1), jnp.float32)
    out2 = jax.block_until_ready(
        offsetnet_forward(off_x2, hidden2, wfc_t, bfc, w9, tb=8))
    ref2 = reference_forward(off_x2, hidden2, wfc_t, bfc, w9)
    np.testing.assert_allclose(np.asarray(out2), np.asarray(ref2),
                               rtol=2e-3, atol=1e-3)
    assert out2.shape == (batch2, 2)

    # Test 3: default (auto) tiling with >=2 grid steps and a partial tail
    # (B=40 -> TB=16, grid=(3,), last block has 8 valid rows).
    batch3 = 40
    k_h3, k_o3 = jax.random.split(k_o)
    hidden3 = jax.random.normal(k_h3, (batch3, in_dim), jnp.float32)
    off_x3 = jax.random.normal(k_o3, (batch3, 1, 1), jnp.float32)
    out3 = jax.block_until_ready(
        offsetnet_forward(off_x3, hidden3, wfc_t, bfc, w9))
    ref3 = reference_forward(off_x3, hidden3, wfc_t, bfc, w9)
    np.testing.assert_allclose(np.asarray(out3), np.asarray(ref3),
                               rtol=2e-3, atol=1e-3)
    assert out3.shape == (batch3, 2)

    print("KERNEL_OK")
</pallas_src>

<mosaic_0001>
module attributes {stable_mosaic.version = 11 : i64} {
  func.func @offsetnet_kernel(%arg0: memref<2x32xf32, #tpu.memory_space<vmem>>, %arg1: memref<32x9xbf16, #tpu.memory_space<vmem>>, %arg2: memref<1x9xf32, #tpu.memory_space<vmem>>, %arg3: memref<2x1xf32, #tpu.memory_space<vmem>>, %arg4: memref<9x3xf32, #tpu.memory_space<vmem>>, %arg5: memref<2x2xf32, #tpu.memory_space<vmem>>) attributes {dimension_semantics = [], scalar_prefetch = 0 : i64, scratch_operands = 0 : i64, tpu.core_type = #tpu.core_type<tc>} {
    %c0 = arith.constant 0 : index
    %c0_0 = arith.constant 0 : index
    %0 = vector.load %arg0[%c0, %c0_0] : memref<2x32xf32, #tpu.memory_space<vmem>>, vector<2x32xf32>
    %1 = arith.truncf %0 : vector<2x32xf32> to vector<2x32xbf16>
    %c0_1 = arith.constant 0 : index
    %c0_2 = arith.constant 0 : index
    %2 = vector.load %arg1[%c0_1, %c0_2] : memref<32x9xbf16, #tpu.memory_space<vmem>>, vector<32x9xbf16>
    %cst = arith.constant dense<0.000000e+00> : vector<2x9xf32>
    %3 = tpu.matmul %1, %2, %cst {dimension_numbers = #tpu.dot_dimension_numbers<[1], [0], [0], [1], [0, 0, 1, 1], [], []>} : vector<2x32xbf16>, vector<32x9xbf16>, vector<2x9xf32> -> vector<2x9xf32>
    %c0_3 = arith.constant 0 : index
    %c0_4 = arith.constant 0 : index
    %4 = vector.load %arg2[%c0_3, %c0_4] : memref<1x9xf32, #tpu.memory_space<vmem>>, vector<1x9xf32>
    %5 = vector.broadcast %4 : vector<1x9xf32> to vector<2x9xf32>
    %6 = arith.addf %3, %5 : vector<2x9xf32>
    %cst_5 = arith.constant dense<0xFF800000> : vector<2xf32>
    %7 = vector.multi_reduction <maximumf>, %6, %cst_5 [1] : vector<2x9xf32> to vector<2xf32>
    %8 = vector.shape_cast %7 : vector<2xf32> to vector<2x1xf32>
    %9 = vector.broadcast %8 : vector<2x1xf32> to vector<2x9xf32>
    %10 = arith.subf %6, %9 : vector<2x9xf32>
    %11 = math.exp %10 : vector<2x9xf32>
    %c0_6 = arith.constant 0 : index
    %c0_7 = arith.constant 0 : index
    %12 = vector.load %arg4[%c0_6, %c0_7] : memref<9x3xf32, #tpu.memory_space<vmem>>, vector<9x3xf32>
    %cst_8 = arith.constant dense<0.000000e+00> : vector<2x3xf32>
    %13 = tpu.matmul %11, %12, %cst_8 {dimension_numbers = #tpu.dot_dimension_numbers<[1], [0], [0], [1], [0, 0, 1, 1], [], []>} : vector<2x9xf32>, vector<9x3xf32>, vector<2x3xf32> -> vector<2x3xf32>
    %c0_9 = arith.constant 0 : index
    %c0_10 = arith.constant 0 : index
    %14 = vector.load %arg3[%c0_9, %c0_10] : memref<2x1xf32, #tpu.memory_space<vmem>>, vector<2x1xf32>
    %15 = vector.extract_strided_slice %13 {offsets = [0, 2], sizes = [2, 1], strides = [1, 1]} : vector<2x3xf32> to vector<2x1xf32>
    %16 = tpu.reciprocal %15 {approx = true} : vector<2x1xf32> -> vector<2x1xf32>
    %17 = arith.mulf %14, %16 : vector<2x1xf32>
    %18 = vector.extract_strided_slice %13 {offsets = [0, 0], sizes = [2, 2], strides = [1, 1]} : vector<2x3xf32> to vector<2x2xf32>
    %19 = vector.broadcast %17 : vector<2x1xf32> to vector<2x2xf32>
    %20 = arith.mulf %18, %19 : vector<2x2xf32>
    %c0_11 = arith.constant 0 : index
    %c0_12 = arith.constant 0 : index
    %21 = vector.load %arg5[%c0_11, %c0_12] : memref<2x2xf32, #tpu.memory_space<vmem>>, vector<2x2xf32>
    tpu.vector_store %arg5[%c0_11, %c0_12], %20 {strides = array<i32>} : memref<2x2xf32, #tpu.memory_space<vmem>>, vector<2x2xf32>,
    return
  }
}

</mosaic_0001>

<llo_original>
// kernel: tpu_custom_call.1
$region0: #{tpu_custom_call.1}
  #allocation0 [shape = 'u32[]', space=smem, size = 0x4, offset = 0x4, fixed_abs, tag = 'smem constant byte address 0x4 - core index']
  #allocation1 [shape = 'u32[144,128]{1,0:T(1,128)}', space=vmem, size = 0x12000, scoped, tag = 'internal scratch']
  %s0 = inlined_call_operand.vmem [shape: f32[2,32], index: 0, kind: input, shape index: {}]
  %s1 = inlined_call_operand.vmem [shape: bf16[32,9], index: 1, kind: input, shape index: {}]
  %s2 = inlined_call_operand.vmem [shape: f32[1,9], index: 2, kind: input, shape index: {}]
  %s3 = inlined_call_operand.vmem [shape: f32[2,1], index: 3, kind: input, shape index: {}]
  %s4 = inlined_call_operand.vmem [shape: f32[9,3], index: 4, kind: input, shape index: {}]
  %s5 = inlined_call_operand.hbm [shape: f32[2,2], index: 5, kind: output, shape index: {}]
  %s6 = sld [smem:[#allocation0]]
  $region30: #{tpu_custom_call.1} parent=0
    _
  %s8 = ssub.s32 1, %s6
  %s9 = scalar_select 0, %s8, %s6
  $region1: #{tpu_custom_call.1} parent=0
    #allocation2 [shape = 'u8[1024]{0}', space=vmem, size = 0x400, scoped, tag = 'output window, operand 0, single buffered']
    #allocation3 [shape = 's32[1]{0}', space=sflag, size = 0x4, scoped, tag = 'scoped memory for tpu_custom_call.1']
    %10 = vsyncpa [#allocation3], 0
    // Predicated region
    $region2: #{tpu_custom_call.1} parent=1 // pred_check
      _
    $region3: #{tpu_custom_call.1} parent=1 // pred_check_branch
      %12 = sbr.rel (0) target = $region5
    $region4: #{tpu_custom_call.1} parent=1 // pred_region
      _
    $region5: #{tpu_custom_call.1} parent=1 // pred_fallthru
      _
    // Predicated region
    $region6: #{tpu_custom_call.1} parent=1 // pred_check
      _
    $region7: #{tpu_custom_call.1} parent=1 // pred_check_branch
      %14 = sbr.rel (0) target = $region9
    $region8: #{tpu_custom_call.1} parent=1 // pred_region
      _
    $region9: #{tpu_custom_call.1} parent=1 // pred_fallthru
      _
    // Predicated region
    $region10: #{tpu_custom_call.1} parent=1 // pred_check
      _
    $region11: #{tpu_custom_call.1} parent=1 // pred_check_branch
      %16 = sbr.rel (0) target = $region13
    $region12: #{tpu_custom_call.1} parent=1 // pred_region
      _
    $region13: #{tpu_custom_call.1} parent=1 // pred_fallthru
      _
    // Predicated region
    $region14: #{tpu_custom_call.1} parent=1 // pred_check
      _
    $region15: #{tpu_custom_call.1} parent=1 // pred_check_branch
      %18 = sbr.rel (0) target = $region17
    $region16: #{tpu_custom_call.1} parent=1 // pred_region
      _
    $region17: #{tpu_custom_call.1} parent=1 // pred_fallthru
      _
    // Predicated region
    $region18: #{tpu_custom_call.1} parent=1 // pred_check
      _
    $region19: #{tpu_custom_call.1} parent=1 // pred_check_branch
      %20 = sbr.rel (0) target = $region21
    $region20: #{tpu_custom_call.1} parent=1 // pred_region
      _
    $region21: #{tpu_custom_call.1} parent=1 // pred_fallthru
      _
    %v22 = vld [vmem:[%s0] sm:$0x3]
    %v23 = vpack.c.bf16 %v22, %v22
    %v24 = vld [vmem:[%s1] sm:$0xf]
    %v25 = vld [vmem:[%s1 + $0x4] sm:$0xf]
    %v26 = vld [vmem:[%s1 + $0x8] sm:$0xf]
    %v27 = vld [vmem:[%s1 + $0xc] sm:$0xf]
    %v28 = vld [vmem:[%s2] sm:$0x1]
    %v30 = vlaneseq
    %v31 = vshrl.u32 %v30, 7
    %v32 = vsub.s32 0, %v31
    %v33 = vrot.slane %v28, %v32
    %v39 = vunpack.c.l.b16 %v24
    %v40 = vunpack.c.l.b16 %v25
    %v41 = vunpack.c.l.b16 %v26
    %v42 = vunpack.c.l.b16 %v27
    %v43 = vpack.c.b16 %v40, %v39
    %v44 = vpack.c.b16 %v42, %v41
    %vm47 = vcmask 261120
    %v49 = vsel %vm47, %v23, 0
    %51 = vmatprep.subr.bf16.mxu0 0
    %52 = vmatpush1.bf16.msra.mxu0 0
    %53 = vmatprep.subr.bf16.mxu0 0
    %54 = vmatpush1.bf16.msra.mxu0 0
    %55 = vmatprep.subr.bf16.mxu0 0
    %56 = vmatpush1.bf16.msra.mxu0 0
    %57 = vmatprep.subr.bf16.mxu0 0
    %58 = vmatpush1.bf16.msra.mxu0 0
    %59 = vmatprep.subr.bf16.mxu0 0
    %60 = vmatpush1.bf16.msra.mxu0 0
    %61 = vmatprep.subr.bf16.mxu0 0
    %62 = vmatpush1.bf16.msra.mxu0 0
    %63 = vmatprep.subr.bf16.mxu0 0
    %64 = vmatpush1.bf16.msra.mxu0 %v44
    %65 = vmatprep.subr.bf16.mxu0 0
    %66 = vmatpush1.bf16.msra.mxu0 %v43
    %67 = vmatprep.subr.bf16.mxu0 0
    %68 = vmatpush2.bf16.msra.mxu0 0
    %69 = vmatprep.subr.bf16.mxu0 0
    %70 = vmatpush2.bf16.msra.mxu0 0
    %71 = vmatprep.subr.bf16.mxu0 0
    %72 = vmatpush2.bf16.msra.mxu0 0
    %73 = vmatprep.subr.bf16.mxu0 0
    %74 = vmatpush2.bf16.msra.mxu0 0
    %75 = vmatprep.subr.bf16.mxu0 0
    %76 = vmatpush2.bf16.msra.mxu0 0
    %77 = vmatprep.subr.bf16.mxu0 0
    %78 = vmatpush2.bf16.msra.mxu0 0
    %79 = vmatprep.subr.bf16.mxu0 0
    %80 = vmatpush2.bf16.msra.mxu0 0
    %81 = vmatprep.subr.bf16.mxu0 0
    %82 = vmatpush2.bf16.msra.mxu0 0
    %83 = vmatprep.mubr.bf16.mxu0 0
    %84 = vmatmul.mubr.bf16.gmra.mxu0 %v49
    %v85 = vpop.f32.mrf.mxu0
    %v86 = vadd.f32 %v33, %v85
    %v87 = vpop.f32.mrf.mxu0
    %v88 = vpop.f32.mrf.mxu0
    %v89 = vpop.f32.mrf.mxu0
    %90 = vdwg.mxu0
    %vm91 = vcmask 66560
    %v92 = vsel %vm91, %v86, -inf
    %93 = vmax.xlane.f32.xlu0 %v92
    %v94 = vpop.xlane.xlu0 %93
    %v95 = vsub.f32 %v86, %v94
    %v96 = vmul.f32 %v95, 1.442695
    %v97 = vpow.pop %v96
    %v98 = vld [vmem:[%s4] sm:$0xff]
    %v99 = vld [vmem:[%s4 + $0x8] sm:$0x1]
    %vm100 = vcmask 72704
    %v102 = vsel %vm100, %v97, 0
    %vm104 = vcmask 1040384
    %v106 = vsel %vm104, %v99, 0
    %108 = vmatprep.subr.mxu0 0.0
    %109 = vmatpush1.msra.mxu0 0.0
    %110 = vmatprep.subr.mxu0 0.0
    %111 = vmatpush1.msra.mxu0 0.0
    %112 = vmatprep.subr.mxu0 0.0
    %113 = vmatpush1.msra.mxu0 0.0
    %114 = vmatprep.subr.mxu0 0.0
    %115 = vmatpush1.msra.mxu0 0.0
    %116 = vmatprep.subr.mxu0 0.0
    %117 = vmatpush1.msra.mxu0 0.0
    %118 = vmatprep.subr.mxu0 0.0
    %119 = vmatpush1.msra.mxu0 0.0
    %120 = vmatprep.subr.mxu0 0.0
    %121 = vmatpush1.msra.mxu0 0.0
    %122 = vmatprep.subr.mxu0 0.0
    %123 = vmatpush1.msra.mxu0 0.0
    %124 = vmatprep.subr.mxu0 0.0
    %125 = vmatpush1.msra.mxu0 0.0
    %126 = vmatprep.subr.mxu0 0.0
    %127 = vmatpush1.msra.mxu0 0.0
    %128 = vmatprep.subr.mxu0 0.0
    %129 = vmatpush1.msra.mxu0 0.0
    %130 = vmatprep.subr.mxu0 0.0
    %131 = vmatpush1.msra.mxu0 0.0
    %132 = vmatprep.subr.mxu0 0.0
    %133 = vmatpush1.msra.mxu0 0.0
    %134 = vmatprep.subr.mxu0 0.0
    %135 = vmatpush1.msra.mxu0 0.0
    %136 = vmatprep.subr.mxu0 0.0
    %137 = vmatpush1.msra.mxu0 %v106
    %138 = vmatprep.subr.mxu0 0.0
    %139 = vmatpush1.msra.mxu0 %v98
    %140 = vmatprep.subr.mxu0 0.0
    %141 = vmatpush2.msra.mxu0 0.0
    %142 = vmatprep.subr.mxu0 0.0
    %143 = vmatpush2.msra.mxu0 0.0
    %144 = vmatprep.subr.mxu0 0.0
    %145 = vmatpush2.msra.mxu0 0.0
    %146 = vmatprep.subr.mxu0 0.0
    %147 = vmatpush2.msra.mxu0 0.0
    %148 = vmatprep.subr.mxu0 0.0
    %149 = vmatpush2.msra.mxu0 0.0
    %150 = vmatprep.subr.mxu0 0.0
    %151 = vmatpush2.msra.mxu0 0.0
    %152 = vmatprep.subr.mxu0 0.0
    %153 = vmatpush2.msra.mxu0 0.0
    %154 = vmatprep.subr.mxu0 0.0
    %155 = vmatpush2.msra.mxu0 0.0
    %156 = vmatprep.subr.mxu0 0.0
    %157 = vmatpush2.msra.mxu0 0.0
    %158 = vmatprep.subr.mxu0 0.0
    %159 = vmatpush2.msra.mxu0 0.0
    %160 = vmatprep.subr.mxu0 0.0
    %161 = vmatpush2.msra.mxu0 0.0
    %162 = vmatprep.subr.mxu0 0.0
    %163 = vmatpush2.msra.mxu0 0.0
    %164 = vmatprep.subr.mxu0 0.0
    %165 = vmatpush2.msra.mxu0 0.0
    %166 = vmatprep.subr.mxu0 0.0
    %167 = vmatpush2.msra.mxu0 0.0
    %168 = vmatprep.subr.mxu0 0.0
    %169 = vmatpush2.msra.mxu0 0.0
    %170 = vmatprep.subr.mxu0 0.0
    %171 = vmatpush2.msra.mxu0 0.0
    %172 = vmatprep.mubr.f32.mxu0 0.0
    %173 = vmatmul.mubr.f32.gmra.mxu0 %v102
    %v174 = vpop.f32.mrf.mxu0
    %v175 = vadd.f32 0.0, %v174
    %v176 = vpop.f32.mrf.mxu0
    %177 = vdwg.mxu0
    %v178 = vld [vmem:[%s3] sm:$0x3]
    %v179 = vrcp.pop %v175
    %181 = vrot.lane.b32.xlu0 %v179, 126
    %v182 = vpop.permute.xlu0 %181
    %v184 = vmul.f32 %v178, %v182
    %186 = vset.pattern.permute.xlu0 0
    %187 = vperm.xlu0 %186, %v184
    %v188 = vpop.permute.xlu0 %187
    %v190 = vmul.f32 %v175, %v188
    %vm191 = vcmask 9216
    %192 = vst.msk [vmem:[#allocation2] sm:$0x3] %vm191, %v190
    // Predicated region
    $region22: #{tpu_custom_call.1} parent=1 // pred_check
      _
    $region23: #{tpu_custom_call.1} parent=1 // pred_check_branch
      %194 = sbr.rel (0) target = $region25
    $region24: #{tpu_custom_call.1} parent=1 // pred_region
      %s196 = ssub.s32 32, 32
      %197 = vsyncadd [#allocation3], %s196
      %s199 = sshll.u32 [#allocation2], 4
      %s200 = int_to_ptr.vmem [resolvable:$true] %s199
      %202 = dma.vmem_to_hbm [thread:$0]  %s200, 32, %s5, [#allocation3]
    $region25: #{tpu_custom_call.1} parent=1 // pred_fallthru
      _
    // Predicated region
    $region26: #{tpu_custom_call.1} parent=1 // pred_check
      _
    $region27: #{tpu_custom_call.1} parent=1 // pred_check_branch
      %204 = sbr.rel (0) target = $region29
    $region28: #{tpu_custom_call.1} parent=1 // pred_region
      %205 = dma.done [#allocation3], 32
    $region29: #{tpu_custom_call.1} parent=1 // pred_fallthru
      _
    %206 = vsyncpa [#allocation3], 1

</llo_original>
